<compile_context>
chip_gen: v7x
topology: tpu7x:2x2x1
jax: 0.10.0
libtpu: 0.0.40
codegen_flags: <defaults>
</compile_context>

<pallas_src>
import math

import jax
import jax.numpy as jnp
from jax import lax
from jax.experimental import pallas as pl
from jax.experimental.pallas import tpu as pltpu


_LN_EPS = 1e-5        # nn.LayerNorm default eps
_NORM_EPS_SQ = 1e-24  # F.normalize: denom = max(||y||, 1e-12) -> clamp ||y||^2 at 1e-24


def _mixvpr_kernel(x_ref, gamma_ref, beta_ref, w1_ref, b1_ref, w2_ref, b2_ref,
                   wc_ref, bc_ref, wrt_ref, br_ref, o_ref):
    bn = x_ref.shape[0]
    depth = gamma_ref.shape[0]

    # Static unroll over the images held in this block (bn is small).
    for i in range(bn):
        x = x_ref[i]                                             # (C, HW) f32

        # --- mix_depth x FeatureMixerLayer: x = x + MLP(LayerNorm_HW(x)) ---
        for d in range(depth):
            mu = jnp.mean(x, axis=1, keepdims=True)              # (C, 1)
            xc = x - mu
            var = jnp.mean(xc * xc, axis=1, keepdims=True)       # (C, 1) biased var
            xn = xc * lax.rsqrt(var + _LN_EPS)                   # rsqrt, no divide
            xn = xn * gamma_ref[d] + beta_ref[d]                 # (C, HW)

            h = jnp.dot(xn, w1_ref[d],
                        preferred_element_type=jnp.float32) + b1_ref[d]   # (C, D)
            h = jnp.maximum(h, 0.0)                                         # ReLU
            x = x + jnp.dot(h, w2_ref[d],
                            preferred_element_type=jnp.float32) + b2_ref[d]  # (C, HW)

        # --- channel_proj: Linear(C -> OC) applied per pixel -> (OC, HW) ---
        z = jnp.dot(wc_ref[...], x,
                    preferred_element_type=jnp.float32) + bc_ref[...]       # (OC, HW)

        # --- row_proj: Linear(HW -> R) -> (OC, R) ---
        y = jnp.dot(z, wrt_ref[...],
                    preferred_element_type=jnp.float32) + br_ref[...]       # (OC, R)

        # --- flatten(1) + F.normalize(p=2) over the whole (OC*R) descriptor ---
        ss = jnp.sum(y * y, keepdims=True)                       # (1, 1)
        y = y * lax.rsqrt(jnp.maximum(ss, _NORM_EPS_SQ))
        o_ref[i] = y


def image_mixvpr(x_nchw, params, *, block_n=8):
    """ImageMixVPR forward. x_nchw: (N, C, H, W) f32. Returns (N, OC * R) f32.

    params (PyTorch layouts):
      ln_gamma, ln_beta : (mix_depth, HW)
      w1, b1            : (mix_depth, D, HW), (mix_depth, D)     D = HW * mlp_ratio
      w2, b2            : (mix_depth, HW, D), (mix_depth, HW)
      wc, bc            : (OC, C), (OC,)
      wr, br            : (R, HW), (R,)
    """
    N, C, H, W = x_nchw.shape
    HW = H * W
    depth, D, _ = params["w1"].shape
    OC = params["wc"].shape[0]
    R = params["wr"].shape[0]

    x3 = x_nchw.reshape(N, C, HW).astype(jnp.float32)

    gamma3 = params["ln_gamma"].reshape(depth, 1, HW).astype(jnp.float32)
    beta3 = params["ln_beta"].reshape(depth, 1, HW).astype(jnp.float32)
    w1t = jnp.transpose(params["w1"], (0, 2, 1)).astype(jnp.float32)   # (depth, HW, D)
    b1_3 = params["b1"].reshape(depth, 1, D).astype(jnp.float32)
    w2t = jnp.transpose(params["w2"], (0, 2, 1)).astype(jnp.float32)   # (depth, D, HW)
    b2_3 = params["b2"].reshape(depth, 1, HW).astype(jnp.float32)
    wc = params["wc"].astype(jnp.float32)                              # (OC, C)
    bc2 = params["bc"].reshape(OC, 1).astype(jnp.float32)
    wrt = params["wr"].T.astype(jnp.float32)                           # (HW, R)
    br2 = params["br"].reshape(1, R).astype(jnp.float32)

    bn = math.gcd(N, block_n)          # images per grid step (divides N)
    grid = (N // bn,)

    const = lambda g: (0, 0, 0)
    const2 = lambda g: (0, 0)

    out3 = pl.pallas_call(
        _mixvpr_kernel,
        out_shape=jax.ShapeDtypeStruct((N, OC, R), jnp.float32),
        grid=grid,
        in_specs=[
            pl.BlockSpec((bn, C, HW), lambda g: (g, 0, 0)),   # x block
            pl.BlockSpec((depth, 1, HW), const),              # ln gamma
            pl.BlockSpec((depth, 1, HW), const),              # ln beta
            pl.BlockSpec((depth, HW, D), const),              # w1^T
            pl.BlockSpec((depth, 1, D), const),               # b1
            pl.BlockSpec((depth, D, HW), const),              # w2^T
            pl.BlockSpec((depth, 1, HW), const),              # b2
            pl.BlockSpec((OC, C), const2),                    # wc
            pl.BlockSpec((OC, 1), const2),                    # bc
            pl.BlockSpec((HW, R), const2),                    # wr^T
            pl.BlockSpec((1, R), const2),                     # br
        ],
        out_specs=pl.BlockSpec((bn, OC, R), lambda g: (g, 0, 0)),
        compiler_params=pltpu.CompilerParams(
            dimension_semantics=("parallel",)),
        # NOTE: at production sizes (C=1024, HW=400) raise vmem_limit_bytes and/or
        # shrink bn so 2 double-buffered (bn, C, HW) f32 blocks fit scoped VMEM.
    )(x3, gamma3, beta3, w1t, b1_3, w2t, b2_3, wc, bc2, wrt, br2)

    return out3.reshape(N, OC * R)


def _reference(x_nchw, params):
    # Pure-JAX reference mirroring the PyTorch ImageMixVPR forward exactly.
    N, C, H, W = x_nchw.shape
    HW = H * W
    x = x_nchw.reshape(N, C, HW).astype(jnp.float32)
    depth = params["ln_gamma"].shape[0]
    for d in range(depth):
        g = params["ln_gamma"][d]
        b = params["ln_beta"][d]
        mu = jnp.mean(x, axis=-1, keepdims=True)
        var = jnp.mean((x - mu) ** 2, axis=-1, keepdims=True)
        xn = (x - mu) / jnp.sqrt(var + _LN_EPS) * g + b
        h = jnp.maximum(xn @ params["w1"][d].T + params["b1"][d], 0.0)
        x = x + h @ params["w2"][d].T + params["b2"][d]
    y = jnp.einsum("nch,oc->noh", x, params["wc"]) + params["bc"][None, :, None]
    y = jnp.einsum("noh,rh->nor", y, params["wr"]) + params["br"][None, None, :]
    y = y.reshape(N, -1)
    nrm = jnp.maximum(jnp.sqrt(jnp.sum(y * y, axis=-1, keepdims=True)), 1e-12)
    return y / nrm


if __name__ == "__main__":
    key = jax.random.PRNGKey(0)
    keys = jax.random.split(key, 10)

    # Small shapes consistent with the module: in_channels=4, in_h=in_w=4,
    # out_channels=8, out_rows=4, mix_depth=1, mlp_ratio=1.
    N, C, H, W = 2, 4, 4, 4
    HW = H * W
    mix_depth = 1
    mlp_ratio = 1
    D = HW * mlp_ratio
    OC = 8
    R = 4

    x = jax.random.normal(keys[0], (N, C, H, W), dtype=jnp.float32)

    params = {
        "ln_gamma": 1.0 + 0.1 * jax.random.normal(keys[1], (mix_depth, HW), jnp.float32),
        "ln_beta": 0.1 * jax.random.normal(keys[2], (mix_depth, HW), jnp.float32),
        "w1": 0.02 * jax.random.normal(keys[3], (mix_depth, D, HW), jnp.float32),
        "b1": 0.01 * jax.random.normal(keys[4], (mix_depth, D), jnp.float32),
        "w2": 0.02 * jax.random.normal(keys[5], (mix_depth, HW, D), jnp.float32),
        "b2": 0.01 * jax.random.normal(keys[6], (mix_depth, HW), jnp.float32),
        "wc": jax.random.uniform(keys[7], (OC, C), jnp.float32, -0.5, 0.5),
        "bc": 0.1 * jax.random.normal(keys[8], (OC,), jnp.float32),
        "wr": jax.random.uniform(keys[9], (R, HW), jnp.float32, -0.25, 0.25),
        "br": 0.1 * jnp.ones((R,), jnp.float32),
    }

    out = image_mixvpr(x, params)
    out = jax.block_until_ready(out)

    ref = _reference(x, params)
    assert out.shape == (N, OC * R), out.shape
    max_err = float(jnp.max(jnp.abs(out - ref)))
    assert jnp.allclose(out, ref, atol=1e-4, rtol=1e-4), f"mismatch vs reference (max abs err {max_err})"

    print("KERNEL_OK")
</pallas_src>

<mosaic_0001>
module attributes {stable_mosaic.version = 11 : i64} {
  func.func @_mixvpr_kernel(%arg0: i32, %arg1: memref<2x4x16xf32, #tpu.memory_space<vmem>>, %arg2: memref<1x1x16xf32, #tpu.memory_space<vmem>>, %arg3: memref<1x1x16xf32, #tpu.memory_space<vmem>>, %arg4: memref<1x16x16xf32, #tpu.memory_space<vmem>>, %arg5: memref<1x1x16xf32, #tpu.memory_space<vmem>>, %arg6: memref<1x16x16xf32, #tpu.memory_space<vmem>>, %arg7: memref<1x1x16xf32, #tpu.memory_space<vmem>>, %arg8: memref<8x4xf32, #tpu.memory_space<vmem>>, %arg9: memref<8x1xf32, #tpu.memory_space<vmem>>, %arg10: memref<16x4xf32, #tpu.memory_space<vmem>>, %arg11: memref<1x4xf32, #tpu.memory_space<vmem>>, %arg12: memref<2x8x4xf32, #tpu.memory_space<vmem>>) attributes {dimension_semantics = [#tpu.dimension_semantics<parallel>], iteration_bounds = array<i64: 1>, scalar_prefetch = 0 : i64, scratch_operands = 0 : i64, tpu.core_type = #tpu.core_type<tc>, window_params = [{transform_indices = @transform_0, window_bounds = array<i64: 2, 4, 16>}, {pipeline_mode = #tpu.pipeline_mode<synchronous>, transform_indices = @transform_1, window_bounds = array<i64: 1, 1, 16>}, {pipeline_mode = #tpu.pipeline_mode<synchronous>, transform_indices = @transform_2, window_bounds = array<i64: 1, 1, 16>}, {pipeline_mode = #tpu.pipeline_mode<synchronous>, transform_indices = @transform_3, window_bounds = array<i64: 1, 16, 16>}, {pipeline_mode = #tpu.pipeline_mode<synchronous>, transform_indices = @transform_4, window_bounds = array<i64: 1, 1, 16>}, {pipeline_mode = #tpu.pipeline_mode<synchronous>, transform_indices = @transform_5, window_bounds = array<i64: 1, 16, 16>}, {pipeline_mode = #tpu.pipeline_mode<synchronous>, transform_indices = @transform_6, window_bounds = array<i64: 1, 1, 16>}, {pipeline_mode = #tpu.pipeline_mode<synchronous>, transform_indices = @transform_7, window_bounds = array<i64: 8, 4>}, {pipeline_mode = #tpu.pipeline_mode<synchronous>, transform_indices = @transform_8, window_bounds = array<i64: 8, 1>}, {pipeline_mode = #tpu.pipeline_mode<synchronous>, transform_indices = @transform_9, window_bounds = array<i64: 16, 4>}, {pipeline_mode = #tpu.pipeline_mode<synchronous>, transform_indices = @transform_10, window_bounds = array<i64: 1, 4>}, {transform_indices = @transform_11, window_bounds = array<i64: 2, 8, 4>}]} {
    %c0 = arith.constant 0 : index
    %c0_0 = arith.constant 0 : index
    %c0_1 = arith.constant 0 : index
    %0 = vector.load %arg1[%c0, %c0_0, %c0_1] : memref<2x4x16xf32, #tpu.memory_space<vmem>>, vector<1x4x16xf32>
    %1 = vector.shape_cast %0 : vector<1x4x16xf32> to vector<4x16xf32>
    %cst = arith.constant dense<0.000000e+00> : vector<4xf32>
    %2 = vector.multi_reduction <add>, %1, %cst [1] : vector<4x16xf32> to vector<4xf32>
    %3 = vector.shape_cast %2 : vector<4xf32> to vector<4x1xf32>
    %cst_2 = arith.constant 1.600000e+01 : f32
    %4 = vector.broadcast %cst_2 : f32 to vector<4x1xf32>
    %5 = arith.divf %3, %4 : vector<4x1xf32>
    %6 = vector.broadcast %5 : vector<4x1xf32> to vector<4x16xf32>
    %7 = arith.subf %1, %6 : vector<4x16xf32>
    %8 = arith.mulf %7, %7 : vector<4x16xf32>
    %cst_3 = arith.constant dense<0.000000e+00> : vector<4xf32>
    %9 = vector.multi_reduction <add>, %8, %cst_3 [1] : vector<4x16xf32> to vector<4xf32>
    %10 = vector.shape_cast %9 : vector<4xf32> to vector<4x1xf32>
    %cst_4 = arith.constant 1.600000e+01 : f32
    %11 = vector.broadcast %cst_4 : f32 to vector<4x1xf32>
    %12 = arith.divf %10, %11 : vector<4x1xf32>
    %cst_5 = arith.constant 9.99999974E-6 : f32
    %13 = vector.broadcast %cst_5 : f32 to vector<4x1xf32>
    %14 = arith.addf %12, %13 : vector<4x1xf32>
    %15 = math.rsqrt %14 : vector<4x1xf32>
    %16 = vector.broadcast %15 : vector<4x1xf32> to vector<4x16xf32>
    %17 = arith.mulf %7, %16 : vector<4x16xf32>
    %c0_6 = arith.constant 0 : index
    %c0_7 = arith.constant 0 : index
    %c0_8 = arith.constant 0 : index
    %18 = vector.load %arg2[%c0_6, %c0_7, %c0_8] : memref<1x1x16xf32, #tpu.memory_space<vmem>>, vector<1x1x16xf32>
    %19 = vector.shape_cast %18 : vector<1x1x16xf32> to vector<1x16xf32>
    %20 = vector.broadcast %19 : vector<1x16xf32> to vector<4x16xf32>
    %21 = arith.mulf %17, %20 : vector<4x16xf32>
    %c0_9 = arith.constant 0 : index
    %c0_10 = arith.constant 0 : index
    %c0_11 = arith.constant 0 : index
    %22 = vector.load %arg3[%c0_9, %c0_10, %c0_11] : memref<1x1x16xf32, #tpu.memory_space<vmem>>, vector<1x1x16xf32>
    %23 = vector.shape_cast %22 : vector<1x1x16xf32> to vector<1x16xf32>
    %24 = vector.broadcast %23 : vector<1x16xf32> to vector<4x16xf32>
    %25 = arith.addf %21, %24 : vector<4x16xf32>
    %c0_12 = arith.constant 0 : index
    %c0_13 = arith.constant 0 : index
    %c0_14 = arith.constant 0 : index
    %26 = vector.load %arg4[%c0_12, %c0_13, %c0_14] : memref<1x16x16xf32, #tpu.memory_space<vmem>>, vector<1x16x16xf32>
    %27 = vector.shape_cast %26 : vector<1x16x16xf32> to vector<16x16xf32>
    %cst_15 = arith.constant dense<0.000000e+00> : vector<4x16xf32>
    %28 = tpu.matmul %25, %27, %cst_15 {dimension_numbers = #tpu.dot_dimension_numbers<[1], [0], [0], [1], [0, 0, 1, 1], [], []>} : vector<4x16xf32>, vector<16x16xf32>, vector<4x16xf32> -> vector<4x16xf32>
    %c0_16 = arith.constant 0 : index
    %c0_17 = arith.constant 0 : index
    %c0_18 = arith.constant 0 : index
    %29 = vector.load %arg5[%c0_16, %c0_17, %c0_18] : memref<1x1x16xf32, #tpu.memory_space<vmem>>, vector<1x1x16xf32>
    %30 = vector.shape_cast %29 : vector<1x1x16xf32> to vector<1x16xf32>
    %31 = vector.broadcast %30 : vector<1x16xf32> to vector<4x16xf32>
    %32 = arith.addf %28, %31 : vector<4x16xf32>
    %cst_19 = arith.constant 0.000000e+00 : f32
    %33 = vector.broadcast %cst_19 : f32 to vector<4x16xf32>
    %34 = arith.maximumf %32, %33 : vector<4x16xf32>
    %c0_20 = arith.constant 0 : index
    %c0_21 = arith.constant 0 : index
    %c0_22 = arith.constant 0 : index
    %35 = vector.load %arg6[%c0_20, %c0_21, %c0_22] : memref<1x16x16xf32, #tpu.memory_space<vmem>>, vector<1x16x16xf32>
    %36 = vector.shape_cast %35 : vector<1x16x16xf32> to vector<16x16xf32>
    %cst_23 = arith.constant dense<0.000000e+00> : vector<4x16xf32>
    %37 = tpu.matmul %34, %36, %cst_23 {dimension_numbers = #tpu.dot_dimension_numbers<[1], [0], [0], [1], [0, 0, 1, 1], [], []>} : vector<4x16xf32>, vector<16x16xf32>, vector<4x16xf32> -> vector<4x16xf32>
    %38 = arith.addf %1, %37 : vector<4x16xf32>
    %c0_24 = arith.constant 0 : index
    %c0_25 = arith.constant 0 : index
    %c0_26 = arith.constant 0 : index
    %39 = vector.load %arg7[%c0_24, %c0_25, %c0_26] : memref<1x1x16xf32, #tpu.memory_space<vmem>>, vector<1x1x16xf32>
    %40 = vector.shape_cast %39 : vector<1x1x16xf32> to vector<1x16xf32>
    %41 = vector.broadcast %40 : vector<1x16xf32> to vector<4x16xf32>
    %42 = arith.addf %38, %41 : vector<4x16xf32>
    %c0_27 = arith.constant 0 : index
    %c0_28 = arith.constant 0 : index
    %43 = vector.load %arg8[%c0_27, %c0_28] : memref<8x4xf32, #tpu.memory_space<vmem>>, vector<8x4xf32>
    %cst_29 = arith.constant dense<0.000000e+00> : vector<8x16xf32>
    %44 = tpu.matmul %43, %42, %cst_29 {dimension_numbers = #tpu.dot_dimension_numbers<[1], [0], [0], [1], [0, 0, 1, 1], [], []>} : vector<8x4xf32>, vector<4x16xf32>, vector<8x16xf32> -> vector<8x16xf32>
    %c0_30 = arith.constant 0 : index
    %c0_31 = arith.constant 0 : index
    %45 = vector.load %arg9[%c0_30, %c0_31] : memref<8x1xf32, #tpu.memory_space<vmem>>, vector<8x1xf32>
    %46 = vector.broadcast %45 : vector<8x1xf32> to vector<8x16xf32>
    %47 = arith.addf %44, %46 : vector<8x16xf32>
    %c0_32 = arith.constant 0 : index
    %c0_33 = arith.constant 0 : index
    %48 = vector.load %arg10[%c0_32, %c0_33] : memref<16x4xf32, #tpu.memory_space<vmem>>, vector<16x4xf32>
    %cst_34 = arith.constant dense<0.000000e+00> : vector<8x4xf32>
    %49 = tpu.matmul %47, %48, %cst_34 {dimension_numbers = #tpu.dot_dimension_numbers<[1], [0], [0], [1], [0, 0, 1, 1], [], []>} : vector<8x16xf32>, vector<16x4xf32>, vector<8x4xf32> -> vector<8x4xf32>
    %c0_35 = arith.constant 0 : index
    %c0_36 = arith.constant 0 : index
    %50 = vector.load %arg11[%c0_35, %c0_36] : memref<1x4xf32, #tpu.memory_space<vmem>>, vector<1x4xf32>
    %51 = vector.broadcast %50 : vector<1x4xf32> to vector<8x4xf32>
    %52 = arith.addf %49, %51 : vector<8x4xf32>
    %53 = arith.mulf %52, %52 : vector<8x4xf32>
    %54 = vector.shape_cast %53 : vector<8x4xf32> to vector<1x8x4xf32>
    %cst_37 = arith.constant dense<0.000000e+00> : vector<1xf32>
    %55 = vector.multi_reduction <add>, %54, %cst_37 [1, 2] : vector<1x8x4xf32> to vector<1xf32>
    %56 = vector.shape_cast %55 : vector<1xf32> to vector<1x1x1xf32>
    %57 = vector.extract %56[0, 0, 0] : f32 from vector<1x1x1xf32>
    %58 = vector.broadcast %57 : f32 to vector<1x1xf32>
    %cst_38 = arith.constant 1.000000e-24 : f32
    %59 = vector.broadcast %cst_38 : f32 to vector<1x1xf32>
    %60 = arith.maximumf %58, %59 : vector<1x1xf32>
    %61 = math.rsqrt %60 : vector<1x1xf32>
    %62 = vector.broadcast %61 : vector<1x1xf32> to vector<8x4xf32>
    %63 = arith.mulf %52, %62 : vector<8x4xf32>
    %c0_39 = arith.constant 0 : index
    %c0_40 = arith.constant 0 : index
    %c0_41 = arith.constant 0 : index
    %64 = vector.load %arg12[%c0_39, %c0_40, %c0_41] : memref<2x8x4xf32, #tpu.memory_space<vmem>>, vector<1x8x4xf32>
    %65 = vector.shape_cast %64 : vector<1x8x4xf32> to vector<8x4xf32>
    %66 = vector.shape_cast %63 : vector<8x4xf32> to vector<1x8x4xf32>
    tpu.vector_store %arg12[%c0_39, %c0_40, %c0_41], %66 {strides = array<i32>} : memref<2x8x4xf32, #tpu.memory_space<vmem>>, vector<1x8x4xf32>,
    %c1 = arith.constant 1 : index
    %c0_42 = arith.constant 0 : index
    %c0_43 = arith.constant 0 : index
    %67 = vector.load %arg1[%c1, %c0_42, %c0_43] : memref<2x4x16xf32, #tpu.memory_space<vmem>>, vector<1x4x16xf32>
    %68 = vector.shape_cast %67 : vector<1x4x16xf32> to vector<4x16xf32>
    %cst_44 = arith.constant dense<0.000000e+00> : vector<4xf32>
    %69 = vector.multi_reduction <add>, %68, %cst_44 [1] : vector<4x16xf32> to vector<4xf32>
    %70 = vector.shape_cast %69 : vector<4xf32> to vector<4x1xf32>
    %cst_45 = arith.constant 1.600000e+01 : f32
    %71 = vector.broadcast %cst_45 : f32 to vector<4x1xf32>
    %72 = arith.divf %70, %71 : vector<4x1xf32>
    %73 = vector.broadcast %72 : vector<4x1xf32> to vector<4x16xf32>
    %74 = arith.subf %68, %73 : vector<4x16xf32>
    %75 = arith.mulf %74, %74 : vector<4x16xf32>
    %cst_46 = arith.constant dense<0.000000e+00> : vector<4xf32>
    %76 = vector.multi_reduction <add>, %75, %cst_46 [1] : vector<4x16xf32> to vector<4xf32>
    %77 = vector.shape_cast %76 : vector<4xf32> to vector<4x1xf32>
    %cst_47 = arith.constant 1.600000e+01 : f32
    %78 = vector.broadcast %cst_47 : f32 to vector<4x1xf32>
    %79 = arith.divf %77, %78 : vector<4x1xf32>
    %cst_48 = arith.constant 9.99999974E-6 : f32
    %80 = vector.broadcast %cst_48 : f32 to vector<4x1xf32>
    %81 = arith.addf %79, %80 : vector<4x1xf32>
    %82 = math.rsqrt %81 : vector<4x1xf32>
    %83 = vector.broadcast %82 : vector<4x1xf32> to vector<4x16xf32>
    %84 = arith.mulf %74, %83 : vector<4x16xf32>
    %c0_49 = arith.constant 0 : index
    %c0_50 = arith.constant 0 : index
    %c0_51 = arith.constant 0 : index
    %85 = vector.load %arg2[%c0_49, %c0_50, %c0_51] : memref<1x1x16xf32, #tpu.memory_space<vmem>>, vector<1x1x16xf32>
    %86 = vector.shape_cast %85 : vector<1x1x16xf32> to vector<1x16xf32>
    %87 = vector.broadcast %86 : vector<1x16xf32> to vector<4x16xf32>
    %88 = arith.mulf %84, %87 : vector<4x16xf32>
    %c0_52 = arith.constant 0 : index
    %c0_53 = arith.constant 0 : index
    %c0_54 = arith.constant 0 : index
    %89 = vector.load %arg3[%c0_52, %c0_53, %c0_54] : memref<1x1x16xf32, #tpu.memory_space<vmem>>, vector<1x1x16xf32>
    %90 = vector.shape_cast %89 : vector<1x1x16xf32> to vector<1x16xf32>
    %91 = vector.broadcast %90 : vector<1x16xf32> to vector<4x16xf32>
    %92 = arith.addf %88, %91 : vector<4x16xf32>
    %c0_55 = arith.constant 0 : index
    %c0_56 = arith.constant 0 : index
    %c0_57 = arith.constant 0 : index
    %93 = vector.load %arg4[%c0_55, %c0_56, %c0_57] : memref<1x16x16xf32, #tpu.memory_space<vmem>>, vector<1x16x16xf32>
    %94 = vector.shape_cast %93 : vector<1x16x16xf32> to vector<16x16xf32>
    %cst_58 = arith.constant dense<0.000000e+00> : vector<4x16xf32>
    %95 = tpu.matmul %92, %94, %cst_58 {dimension_numbers = #tpu.dot_dimension_numbers<[1], [0], [0], [1], [0, 0, 1, 1], [], []>} : vector<4x16xf32>, vector<16x16xf32>, vector<4x16xf32> -> vector<4x16xf32>
    %c0_59 = arith.constant 0 : index
    %c0_60 = arith.constant 0 : index
    %c0_61 = arith.constant 0 : index
    %96 = vector.load %arg5[%c0_59, %c0_60, %c0_61] : memref<1x1x16xf32, #tpu.memory_space<vmem>>, vector<1x1x16xf32>
    %97 = vector.shape_cast %96 : vector<1x1x16xf32> to vector<1x16xf32>
    %98 = vector.broadcast %97 : vector<1x16xf32> to vector<4x16xf32>
    %99 = arith.addf %95, %98 : vector<4x16xf32>
    %cst_62 = arith.constant 0.000000e+00 : f32
    %100 = vector.broadcast %cst_62 : f32 to vector<4x16xf32>
    %101 = arith.maximumf %99, %100 : vector<4x16xf32>
    %c0_63 = arith.constant 0 : index
    %c0_64 = arith.constant 0 : index
    %c0_65 = arith.constant 0 : index
    %102 = vector.load %arg6[%c0_63, %c0_64, %c0_65] : memref<1x16x16xf32, #tpu.memory_space<vmem>>, vector<1x16x16xf32>
    %103 = vector.shape_cast %102 : vector<1x16x16xf32> to vector<16x16xf32>
    %cst_66 = arith.constant dense<0.000000e+00> : vector<4x16xf32>
    %104 = tpu.matmul %101, %103, %cst_66 {dimension_numbers = #tpu.dot_dimension_numbers<[1], [0], [0], [1], [0, 0, 1, 1], [], []>} : vector<4x16xf32>, vector<16x16xf32>, vector<4x16xf32> -> vector<4x16xf32>
    %105 = arith.addf %68, %104 : vector<4x16xf32>
    %c0_67 = arith.constant 0 : index
    %c0_68 = arith.constant 0 : index
    %c0_69 = arith.constant 0 : index
    %106 = vector.load %arg7[%c0_67, %c0_68, %c0_69] : memref<1x1x16xf32, #tpu.memory_space<vmem>>, vector<1x1x16xf32>
    %107 = vector.shape_cast %106 : vector<1x1x16xf32> to vector<1x16xf32>
    %108 = vector.broadcast %107 : vector<1x16xf32> to vector<4x16xf32>
    %109 = arith.addf %105, %108 : vector<4x16xf32>
    %c0_70 = arith.constant 0 : index
    %c0_71 = arith.constant 0 : index
    %110 = vector.load %arg8[%c0_70, %c0_71] : memref<8x4xf32, #tpu.memory_space<vmem>>, vector<8x4xf32>
    %cst_72 = arith.constant dense<0.000000e+00> : vector<8x16xf32>
    %111 = tpu.matmul %110, %109, %cst_72 {dimension_numbers = #tpu.dot_dimension_numbers<[1], [0], [0], [1], [0, 0, 1, 1], [], []>} : vector<8x4xf32>, vector<4x16xf32>, vector<8x16xf32> -> vector<8x16xf32>
    %c0_73 = arith.constant 0 : index
    %c0_74 = arith.constant 0 : index
    %112 = vector.load %arg9[%c0_73, %c0_74] : memref<8x1xf32, #tpu.memory_space<vmem>>, vector<8x1xf32>
    %113 = vector.broadcast %112 : vector<8x1xf32> to vector<8x16xf32>
    %114 = arith.addf %111, %113 : vector<8x16xf32>
    %c0_75 = arith.constant 0 : index
    %c0_76 = arith.constant 0 : index
    %115 = vector.load %arg10[%c0_75, %c0_76] : memref<16x4xf32, #tpu.memory_space<vmem>>, vector<16x4xf32>
    %cst_77 = arith.constant dense<0.000000e+00> : vector<8x4xf32>
    %116 = tpu.matmul %114, %115, %cst_77 {dimension_numbers = #tpu.dot_dimension_numbers<[1], [0], [0], [1], [0, 0, 1, 1], [], []>} : vector<8x16xf32>, vector<16x4xf32>, vector<8x4xf32> -> vector<8x4xf32>
    %c0_78 = arith.constant 0 : index
    %c0_79 = arith.constant 0 : index
    %117 = vector.load %arg11[%c0_78, %c0_79] : memref<1x4xf32, #tpu.memory_space<vmem>>, vector<1x4xf32>
    %118 = vector.broadcast %117 : vector<1x4xf32> to vector<8x4xf32>
    %119 = arith.addf %116, %118 : vector<8x4xf32>
    %120 = arith.mulf %119, %119 : vector<8x4xf32>
    %121 = vector.shape_cast %120 : vector<8x4xf32> to vector<1x8x4xf32>
    %cst_80 = arith.constant dense<0.000000e+00> : vector<1xf32>
    %122 = vector.multi_reduction <add>, %121, %cst_80 [1, 2] : vector<1x8x4xf32> to vector<1xf32>
    %123 = vector.shape_cast %122 : vector<1xf32> to vector<1x1x1xf32>
    %124 = vector.extract %123[0, 0, 0] : f32 from vector<1x1x1xf32>
    %125 = vector.broadcast %124 : f32 to vector<1x1xf32>
    %cst_81 = arith.constant 1.000000e-24 : f32
    %126 = vector.broadcast %cst_81 : f32 to vector<1x1xf32>
    %127 = arith.maximumf %125, %126 : vector<1x1xf32>
    %128 = math.rsqrt %127 : vector<1x1xf32>
    %129 = vector.broadcast %128 : vector<1x1xf32> to vector<8x4xf32>
    %130 = arith.mulf %119, %129 : vector<8x4xf32>
    %c1_82 = arith.constant 1 : index
    %c0_83 = arith.constant 0 : index
    %c0_84 = arith.constant 0 : index
    %131 = vector.load %arg12[%c1_82, %c0_83, %c0_84] : memref<2x8x4xf32, #tpu.memory_space<vmem>>, vector<1x8x4xf32>
    %132 = vector.shape_cast %131 : vector<1x8x4xf32> to vector<8x4xf32>
    %133 = vector.shape_cast %130 : vector<8x4xf32> to vector<1x8x4xf32>
    tpu.vector_store %arg12[%c1_82, %c0_83, %c0_84], %133 {strides = array<i32>} : memref<2x8x4xf32, #tpu.memory_space<vmem>>, vector<1x8x4xf32>,
    return
  }
  func.func @transform_0(%arg0: i32) -> (i32, i32, i32) {
    %c0_i32 = arith.constant 0 : i32
    %c0_i32_0 = arith.constant 0 : i32
    %c0_i32_1 = arith.constant 0 : i32
    return %arg0, %c0_i32, %c0_i32_0 : i32, i32, i32
  }
  func.func @transform_1(%arg0: i32) -> (i32, i32, i32) {
    %c0_i32 = arith.constant 0 : i32
    %c0_i32_0 = arith.constant 0 : i32
    %c0_i32_1 = arith.constant 0 : i32
    %c0_i32_2 = arith.constant 0 : i32
    return %c0_i32, %c0_i32_0, %c0_i32_1 : i32, i32, i32
  }
  func.func @transform_2(%arg0: i32) -> (i32, i32, i32) {
    %c0_i32 = arith.constant 0 : i32
    %c0_i32_0 = arith.constant 0 : i32
    %c0_i32_1 = arith.constant 0 : i32
    %c0_i32_2 = arith.constant 0 : i32
    return %c0_i32, %c0_i32_0, %c0_i32_1 : i32, i32, i32
  }
  func.func @transform_3(%arg0: i32) -> (i32, i32, i32) {
    %c0_i32 = arith.constant 0 : i32
    %c0_i32_0 = arith.constant 0 : i32
    %c0_i32_1 = arith.constant 0 : i32
    %c0_i32_2 = arith.constant 0 : i32
    return %c0_i32, %c0_i32_0, %c0_i32_1 : i32, i32, i32
  }
  func.func @transform_4(%arg0: i32) -> (i32, i32, i32) {
    %c0_i32 = arith.constant 0 : i32
    %c0_i32_0 = arith.constant 0 : i32
    %c0_i32_1 = arith.constant 0 : i32
    %c0_i32_2 = arith.constant 0 : i32
    return %c0_i32, %c0_i32_0, %c0_i32_1 : i32, i32, i32
  }
  func.func @transform_5(%arg0: i32) -> (i32, i32, i32) {
    %c0_i32 = arith.constant 0 : i32
    %c0_i32_0 = arith.constant 0 : i32
    %c0_i32_1 = arith.constant 0 : i32
    %c0_i32_2 = arith.constant 0 : i32
    return %c0_i32, %c0_i32_0, %c0_i32_1 : i32, i32, i32
  }
  func.func @transform_6(%arg0: i32) -> (i32, i32, i32) {
    %c0_i32 = arith.constant 0 : i32
    %c0_i32_0 = arith.constant 0 : i32
    %c0_i32_1 = arith.constant 0 : i32
    %c0_i32_2 = arith.constant 0 : i32
    return %c0_i32, %c0_i32_0, %c0_i32_1 : i32, i32, i32
  }
  func.func @transform_7(%arg0: i32) -> (i32, i32) {
    %c0_i32 = arith.constant 0 : i32
    %c0_i32_0 = arith.constant 0 : i32
    %c0_i32_1 = arith.constant 0 : i32
    return %c0_i32, %c0_i32_0 : i32, i32
  }
  func.func @transform_8(%arg0: i32) -> (i32, i32) {
    %c0_i32 = arith.constant 0 : i32
    %c0_i32_0 = arith.constant 0 : i32
    %c0_i32_1 = arith.constant 0 : i32
    return %c0_i32, %c0_i32_0 : i32, i32
  }
  func.func @transform_9(%arg0: i32) -> (i32, i32) {
    %c0_i32 = arith.constant 0 : i32
    %c0_i32_0 = arith.constant 0 : i32
    %c0_i32_1 = arith.constant 0 : i32
    return %c0_i32, %c0_i32_0 : i32, i32
  }
  func.func @transform_10(%arg0: i32) -> (i32, i32) {
    %c0_i32 = arith.constant 0 : i32
    %c0_i32_0 = arith.constant 0 : i32
    %c0_i32_1 = arith.constant 0 : i32
    return %c0_i32, %c0_i32_0 : i32, i32
  }
  func.func @transform_11(%arg0: i32) -> (i32, i32, i32) {
    %c0_i32 = arith.constant 0 : i32
    %c0_i32_0 = arith.constant 0 : i32
    %c0_i32_1 = arith.constant 0 : i32
    return %arg0, %c0_i32, %c0_i32_0 : i32, i32, i32
  }
}

</mosaic_0001>

<llo_original>
// kernel: tpu_custom_call.1
$region0: #{tpu_custom_call.1}
  #allocation0 [shape = 'u32[]', space=smem, size = 0x4, offset = 0x4, fixed_abs, tag = 'smem constant byte address 0x4 - core index']
  #allocation1 [shape = 'u32[144,128]{1,0:T(1,128)}', space=vmem, size = 0x12000, scoped, tag = 'internal scratch']
  %s0 = inlined_call_operand.vmem [shape: f32[2,4,16], index: 0, kind: input, shape index: {}]
  %s1 = inlined_call_operand.hbm [shape: f32[1,1,16], index: 1, kind: input, shape index: {}]
  %s2 = inlined_call_operand.hbm [shape: f32[1,1,16], index: 2, kind: input, shape index: {}]
  %s3 = inlined_call_operand.vmem [shape: f32[1,16,16], index: 3, kind: input, shape index: {}]
  %s4 = inlined_call_operand.vmem [shape: f32[1,1,16], index: 4, kind: input, shape index: {}]
  %s5 = inlined_call_operand.vmem [shape: f32[1,16,16], index: 5, kind: input, shape index: {}]
  %s6 = inlined_call_operand.vmem [shape: f32[1,1,16], index: 6, kind: input, shape index: {}]
  %s7 = inlined_call_operand.vmem [shape: f32[8,4], index: 7, kind: input, shape index: {}]
  %s8 = inlined_call_operand.vmem [shape: f32[8,1], index: 8, kind: input, shape index: {}]
  %s9 = inlined_call_operand.vmem [shape: f32[16,4], index: 9, kind: input, shape index: {}]
  %s10 = inlined_call_operand.vmem [shape: f32[1,4], index: 10, kind: input, shape index: {}]
  %s11 = inlined_call_operand.vmem [shape: f32[2,8,4], index: 11, kind: output, shape index: {}]
  %s12 = sld [smem:[#allocation0]]
  $region62: #{tpu_custom_call.1} parent=0
    _
  %s14 = ssub.s32 1, %s12
  %s15 = scalar_select 0, %s14, %s12
  $region1: #{tpu_custom_call.1} parent=0
    #allocation2 [shape = 'u8[512]{0}', space=vmem, size = 0x400, scoped, tag = 'input window, operand 1, single buffered']
    #allocation3 [shape = 's32[1]{0}', space=sflag, size = 0x4, scoped, tag = 'scoped memory for tpu_custom_call.1']
    #allocation4 [shape = 'u8[512]{0}', space=vmem, size = 0x400, scoped, tag = 'input window, operand 2, single buffered']
    #allocation5 [shape = 's32[1]{0}', space=sflag, size = 0x4, scoped, tag = 'scoped memory for tpu_custom_call.1']
    %16 = vsyncpa [#allocation3], 0
    %17 = vsyncpa [#allocation5], 0
    // Predicated region
    $region2: #{tpu_custom_call.1} parent=1 // pred_check
      _
    $region3: #{tpu_custom_call.1} parent=1 // pred_check_branch
      %19 = sbr.rel (0) target = $region5
    $region4: #{tpu_custom_call.1} parent=1 // pred_region
      _
    $region5: #{tpu_custom_call.1} parent=1 // pred_fallthru
      _
    // Predicated region
    $region6: #{tpu_custom_call.1} parent=1 // pred_check
      _
    $region7: #{tpu_custom_call.1} parent=1 // pred_check_branch
      %21 = sbr.rel (0) target = $region9
    $region8: #{tpu_custom_call.1} parent=1 // pred_region
      %s23 = ssub.s32 16, 16
      %24 = vsyncadd [#allocation3], %s23
      %s26 = sshll.u32 [#allocation2], 4
      %s27 = int_to_ptr.vmem [resolvable:$true] %s26
      %29 = dma.hbm_to_vmem [thread:$0]  %s1, 16, %s27, [#allocation3]
    $region9: #{tpu_custom_call.1} parent=1 // pred_fallthru
      _
    // Predicated region
    $region10: #{tpu_custom_call.1} parent=1 // pred_check
      _
    $region11: #{tpu_custom_call.1} parent=1 // pred_check_branch
      %31 = sbr.rel (0) target = $region13
    $region12: #{tpu_custom_call.1} parent=1 // pred_region
      %s33 = ssub.s32 16, 16
      %34 = vsyncadd [#allocation5], %s33
      %s36 = sshll.u32 [#allocation4], 4
      %s37 = int_to_ptr.vmem [resolvable:$true] %s36
      %39 = dma.hbm_to_vmem [thread:$0]  %s2, 16, %s37, [#allocation5]
    $region13: #{tpu_custom_call.1} parent=1 // pred_fallthru
      _
    // Predicated region
    $region14: #{tpu_custom_call.1} parent=1 // pred_check
      _
    $region15: #{tpu_custom_call.1} parent=1 // pred_check_branch
      %41 = sbr.rel (0) target = $region17
    $region16: #{tpu_custom_call.1} parent=1 // pred_region
      _
    $region17: #{tpu_custom_call.1} parent=1 // pred_fallthru
      _
    // Predicated region
    $region18: #{tpu_custom_call.1} parent=1 // pred_check
      _
    $region19: #{tpu_custom_call.1} parent=1 // pred_check_branch
      %43 = sbr.rel (0) target = $region21
    $region20: #{tpu_custom_call.1} parent=1 // pred_region
      _
    $region21: #{tpu_custom_call.1} parent=1 // pred_fallthru
      _
    // Predicated region
    $region22: #{tpu_custom_call.1} parent=1 // pred_check
      _
    $region23: #{tpu_custom_call.1} parent=1 // pred_check_branch
      %45 = sbr.rel (0) target = $region25
    $region24: #{tpu_custom_call.1} parent=1 // pred_region
      _
    $region25: #{tpu_custom_call.1} parent=1 // pred_fallthru
      _
    // Predicated region
    $region26: #{tpu_custom_call.1} parent=1 // pred_check
      _
    $region27: #{tpu_custom_call.1} parent=1 // pred_check_branch
      %47 = sbr.rel (0) target = $region29
    $region28: #{tpu_custom_call.1} parent=1 // pred_region
      _
    $region29: #{tpu_custom_call.1} parent=1 // pred_fallthru
      _
    // Predicated region
    $region30: #{tpu_custom_call.1} parent=1 // pred_check
      _
    $region31: #{tpu_custom_call.1} parent=1 // pred_check_branch
      %49 = sbr.rel (0) target = $region33
    $region32: #{tpu_custom_call.1} parent=1 // pred_region
      _
    $region33: #{tpu_custom_call.1} parent=1 // pred_fallthru
      _
    // Predicated region
    $region34: #{tpu_custom_call.1} parent=1 // pred_check
      _
    $region35: #{tpu_custom_call.1} parent=1 // pred_check_branch
      %51 = sbr.rel (0) target = $region37
    $region36: #{tpu_custom_call.1} parent=1 // pred_region
      _
    $region37: #{tpu_custom_call.1} parent=1 // pred_fallthru
      _
    // Predicated region
    $region38: #{tpu_custom_call.1} parent=1 // pred_check
      _
    $region39: #{tpu_custom_call.1} parent=1 // pred_check_branch
      %53 = sbr.rel (0) target = $region41
    $region40: #{tpu_custom_call.1} parent=1 // pred_region
      _
    $region41: #{tpu_custom_call.1} parent=1 // pred_fallthru
      _
    // Predicated region
    $region42: #{tpu_custom_call.1} parent=1 // pred_check
      _
    $region43: #{tpu_custom_call.1} parent=1 // pred_check_branch
      %55 = sbr.rel (0) target = $region45
    $region44: #{tpu_custom_call.1} parent=1 // pred_region
      _
    $region45: #{tpu_custom_call.1} parent=1 // pred_fallthru
      _
    // Predicated region
    $region46: #{tpu_custom_call.1} parent=1 // pred_check
      _
    $region47: #{tpu_custom_call.1} parent=1 // pred_check_branch
      %57 = sbr.rel (0) target = $region49
    $region48: #{tpu_custom_call.1} parent=1 // pred_region
      %58 = dma.done [#allocation3], 16
    $region49: #{tpu_custom_call.1} parent=1 // pred_fallthru
      _
    // Predicated region
    $region50: #{tpu_custom_call.1} parent=1 // pred_check
      _
    $region51: #{tpu_custom_call.1} parent=1 // pred_check_branch
      %60 = sbr.rel (0) target = $region53
    $region52: #{tpu_custom_call.1} parent=1 // pred_region
      %61 = dma.done [#allocation5], 16
    $region53: #{tpu_custom_call.1} parent=1 // pred_fallthru
      _
    %v62 = vld [vmem:[%s0] sm:$0xf]
    %vm63 = vcmask 125952
    %v64 = vsel %vm63, %v62, 0.0
    %65 = vadd.xlane.f32.xlu0 %v64
    %v66 = vpop.xlane.xlu0 %65
    %v67 = vrcp.pop 16.0
    %v68 = vmul.f32 %v66, %v67
    %v69 = vsub.f32 %v62, %v68
    %v70 = vmul.f32 %v69, %v69
    %v71 = vsel %vm63, %v70, 0.0
    %72 = vadd.xlane.f32.xlu0 %v71
    %v73 = vpop.xlane.xlu0 %72
    %v74 = vmul.f32 %v73, %v67
    %v75 = vadd.f32 %v74, 1e-05
    %v76 = vrsqrt.pop %v75
    %v77 = vmul.f32 %v69, %v76
    %v78 = vld [vmem:[#allocation2] sm:$0x1]
    %v80 = vlaneseq
    %v81 = vshrl.u32 %v80, 7
    %v82 = vsub.s32 0, %v81
    %v83 = vrot.slane %v78, %v82
    %v85 = vmul.f32 %v77, %v83
    %v86 = vld [vmem:[#allocation4] sm:$0x1]
    %v88 = vlaneseq
    %v89 = vshrl.u32 %v88, 7
    %v90 = vsub.s32 0, %v89
    %v91 = vrot.slane %v86, %v90
    %v93 = vadd.f32 %v85, %v91
    %v94 = vld [vmem:[%s3] sm:$0xff]
    %v95 = vld [vmem:[%s3 + $0x8] sm:$0xff]
    %v96 = vld [vmem:[%s4] sm:$0x1]
    %v98 = vlaneseq
    %v99 = vshrl.u32 %v98, 7
    %v100 = vsub.s32 0, %v99
    %v101 = vrot.slane %v96, %v100
    %vm103 = vcmask 130048
    %v105 = vsel %vm103, %v93, 0
    %107 = vmatprep.subr.mxu0 0.0
    %108 = vmatpush1.msra.mxu0 %v94
    %109 = vmatprep.subr.mxu0 0.0
    %110 = vmatpush1.msra.mxu0 %v95
    %111 = vmatprep.subr.mxu0 0.0
    %112 = vmatpush1.msra.mxu0 0.0
    %113 = vmatprep.subr.mxu0 0.0
    %114 = vmatpush1.msra.mxu0 0.0
    %115 = vmatprep.subr.mxu0 0.0
    %116 = vmatpush1.msra.mxu0 0.0
    %117 = vmatprep.subr.mxu0 0.0
    %118 = vmatpush1.msra.mxu0 0.0
    %119 = vmatprep.subr.mxu0 0.0
    %120 = vmatpush1.msra.mxu0 0.0
    %121 = vmatprep.subr.mxu0 0.0
    %122 = vmatpush1.msra.mxu0 0.0
    %123 = vmatprep.subr.mxu0 0.0
    %124 = vmatpush1.msra.mxu0 0.0
    %125 = vmatprep.subr.mxu0 0.0
    %126 = vmatpush1.msra.mxu0 0.0
    %127 = vmatprep.subr.mxu0 0.0
    %128 = vmatpush1.msra.mxu0 0.0
    %129 = vmatprep.subr.mxu0 0.0
    %130 = vmatpush1.msra.mxu0 0.0
    %131 = vmatprep.subr.mxu0 0.0
    %132 = vmatpush1.msra.mxu0 0.0
    %133 = vmatprep.subr.mxu0 0.0
    %134 = vmatpush1.msra.mxu0 0.0
    %135 = vmatprep.subr.mxu0 0.0
    %136 = vmatpush1.msra.mxu0 0.0
    %137 = vmatprep.subr.mxu0 0.0
    %138 = vmatpush1.msra.mxu0 0.0
    %139 = vmatprep.subr.mxu0 0.0
    %140 = vmatpush1.msra.mxu0 0.0
    %141 = vmatprep.subr.mxu0 0.0
    %142 = vmatpush1.msra.mxu0 0.0
    %143 = vmatprep.subr.mxu0 0.0
    %144 = vmatpush1.msra.mxu0 0.0
    %145 = vmatprep.subr.mxu0 0.0
    %146 = vmatpush1.msra.mxu0 0.0
    %147 = vmatprep.subr.mxu0 0.0
    %148 = vmatpush1.msra.mxu0 0.0
    %149 = vmatprep.subr.mxu0 0.0
    %150 = vmatpush1.msra.mxu0 0.0
    %151 = vmatprep.subr.mxu0 0.0
    %152 = vmatpush1.msra.mxu0 0.0
    %153 = vmatprep.subr.mxu0 0.0
    %154 = vmatpush1.msra.mxu0 0.0
    %155 = vmatprep.subr.mxu0 0.0
    %156 = vmatpush1.msra.mxu0 0.0
    %157 = vmatprep.subr.mxu0 0.0
    %158 = vmatpush1.msra.mxu0 0.0
    %159 = vmatprep.subr.mxu0 0.0
    %160 = vmatpush1.msra.mxu0 0.0
    %161 = vmatprep.subr.mxu0 0.0
    %162 = vmatpush1.msra.mxu0 0.0
    %163 = vmatprep.subr.mxu0 0.0
    %164 = vmatpush1.msra.mxu0 0.0
    %165 = vmatprep.subr.mxu0 0.0
    %166 = vmatpush1.msra.mxu0 0.0
    %167 = vmatprep.subr.mxu0 0.0
    %168 = vmatpush1.msra.mxu0 0.0
    %169 = vmatprep.subr.mxu0 0.0
    %170 = vmatpush1.msra.mxu0 0.0
    %171 = vmatprep.mubr.f32.mxu0 0.0
    %172 = vmatmul.mubr.f32.gmra.mrb[0].mxu0 %v105
    %v173 = vpop.f32.mrb[0].mxu0
    %v174 = vadd.f32 %v101, %v173
    %v175 = vpop.f32.mrb[0].mxu0
    %176 = vdwg.mxu0
    %v177 = vmax.f32 %v174, 0.0
    %v178 = vld [vmem:[%s5] sm:$0xff]
    %v179 = vld [vmem:[%s5 + $0x8] sm:$0xff]
    %v181 = vsel %vm103, %v177, 0
    %183 = vmatprep.subr.mxu0 0.0
    %184 = vmatpush1.msra.mxu0 %v178
    %185 = vmatprep.subr.mxu0 0.0
    %186 = vmatpush1.msra.mxu0 %v179
    %187 = vmatprep.subr.mxu0 0.0
    %188 = vmatpush1.msra.mxu0 0.0
    %189 = vmatprep.subr.mxu0 0.0
    %190 = vmatpush1.msra.mxu0 0.0
    %191 = vmatprep.subr.mxu0 0.0
    %192 = vmatpush1.msra.mxu0 0.0
    %193 = vmatprep.subr.mxu0 0.0
    %194 = vmatpush1.msra.mxu0 0.0
    %195 = vmatprep.subr.mxu0 0.0
    %196 = vmatpush1.msra.mxu0 0.0
    %197 = vmatprep.subr.mxu0 0.0
    %198 = vmatpush1.msra.mxu0 0.0
    %199 = vmatprep.subr.mxu0 0.0
    %200 = vmatpush1.msra.mxu0 0.0
    %201 = vmatprep.subr.mxu0 0.0
    %202 = vmatpush1.msra.mxu0 0.0
    %203 = vmatprep.subr.mxu0 0.0
    %204 = vmatpush1.msra.mxu0 0.0
    %205 = vmatprep.subr.mxu0 0.0
    %206 = vmatpush1.msra.mxu0 0.0
    %207 = vmatprep.subr.mxu0 0.0
    %208 = vmatpush1.msra.mxu0 0.0
    %209 = vmatprep.subr.mxu0 0.0
    %210 = vmatpush1.msra.mxu0 0.0
    %211 = vmatprep.subr.mxu0 0.0
    %212 = vmatpush1.msra.mxu0 0.0
    %213 = vmatprep.subr.mxu0 0.0
    %214 = vmatpush1.msra.mxu0 0.0
    %215 = vmatprep.subr.mxu0 0.0
    %216 = vmatpush1.msra.mxu0 0.0
    %217 = vmatprep.subr.mxu0 0.0
    %218 = vmatpush1.msra.mxu0 0.0
    %219 = vmatprep.subr.mxu0 0.0
    %220 = vmatpush1.msra.mxu0 0.0
    %221 = vmatprep.subr.mxu0 0.0
    %222 = vmatpush1.msra.mxu0 0.0
    %223 = vmatprep.subr.mxu0 0.0
    %224 = vmatpush1.msra.mxu0 0.0
    %225 = vmatprep.subr.mxu0 0.0
    %226 = vmatpush1.msra.mxu0 0.0
    %227 = vmatprep.subr.mxu0 0.0
    %228 = vmatpush1.msra.mxu0 0.0
    %229 = vmatprep.subr.mxu0 0.0
    %230 = vmatpush1.msra.mxu0 0.0
    %231 = vmatprep.subr.mxu0 0.0
    %232 = vmatpush1.msra.mxu0 0.0
    %233 = vmatprep.subr.mxu0 0.0
    %234 = vmatpush1.msra.mxu0 0.0
    %235 = vmatprep.subr.mxu0 0.0
    %236 = vmatpush1.msra.mxu0 0.0
    %237 = vmatprep.subr.mxu0 0.0
    %238 = vmatpush1.msra.mxu0 0.0
    %239 = vmatprep.subr.mxu0 0.0
    %240 = vmatpush1.msra.mxu0 0.0
    %241 = vmatprep.subr.mxu0 0.0
    %242 = vmatpush1.msra.mxu0 0.0
    %243 = vmatprep.subr.mxu0 0.0
    %244 = vmatpush1.msra.mxu0 0.0
    %245 = vmatprep.subr.mxu0 0.0
    %246 = vmatpush1.msra.mxu0 0.0
    %247 = vmatprep.mubr.f32.mxu0 0.0
    %248 = vmatmul.mubr.f32.gmra.mrb[0].mxu0 %v181
    %v249 = vpop.f32.mrb[0].mxu0
    %v250 = vadd.f32 0.0, %v249
    %v251 = vpop.f32.mrb[0].mxu0
    %252 = vdwg.mxu0
    %v253 = vadd.f32 %v62, %v250
    %v254 = vld [vmem:[%s6] sm:$0x1]
    %v256 = vlaneseq
    %v257 = vshrl.u32 %v256, 7
    %v258 = vsub.s32 0, %v257
    %v259 = vrot.slane %v254, %v258
    %v261 = vadd.f32 %v253, %v259
    %v262 = vld [vmem:[%s7] sm:$0xff]
    %v263 = vld [vmem:[%s8] sm:$0xff]
    %265 = vset.pattern.permute.xlu0 0
    %266 = vperm.xlu0 %265, %v263
    %v267 = vpop.permute.xlu0 %266
    %vm269 = vcmask 31744
    %v271 = vsel %vm269, %v262, 0
    %vm273 = vcmask 1043456
    %v275 = vsel %vm273, %v261, 0
    %277 = vmatprep.subr.mxu0 0.0
    %278 = vmatpush1.msra.mxu0 %v275
    %279 = vmatprep.subr.mxu0 0.0
    %280 = vmatpush1.msra.mxu0 0.0
    %281 = vmatprep.subr.mxu0 0.0
    %282 = vmatpush1.msra.mxu0 0.0
    %283 = vmatprep.subr.mxu0 0.0
    %284 = vmatpush1.msra.mxu0 0.0
    %285 = vmatprep.subr.mxu0 0.0
    %286 = vmatpush1.msra.mxu0 0.0
    %287 = vmatprep.subr.mxu0 0.0
    %288 = vmatpush1.msra.mxu0 0.0
    %289 = vmatprep.subr.mxu0 0.0
    %290 = vmatpush1.msra.mxu0 0.0
    %291 = vmatprep.subr.mxu0 0.0
    %292 = vmatpush1.msra.mxu0 0.0
    %293 = vmatprep.subr.mxu0 0.0
    %294 = vmatpush1.msra.mxu0 0.0
    %295 = vmatprep.subr.mxu0 0.0
    %296 = vmatpush1.msra.mxu0 0.0
    %297 = vmatprep.subr.mxu0 0.0
    %298 = vmatpush1.msra.mxu0 0.0
    %299 = vmatprep.subr.mxu0 0.0
    %300 = vmatpush1.msra.mxu0 0.0
    %301 = vmatprep.subr.mxu0 0.0
    %302 = vmatpush1.msra.mxu0 0.0
    %303 = vmatprep.subr.mxu0 0.0
    %304 = vmatpush1.msra.mxu0 0.0
    %305 = vmatprep.subr.mxu0 0.0
    %306 = vmatpush1.msra.mxu0 0.0
    %307 = vmatprep.subr.mxu0 0.0
    %308 = vmatpush1.msra.mxu0 0.0
    %309 = vmatprep.subr.mxu0 0.0
    %310 = vmatpush1.msra.mxu0 0.0
    %311 = vmatprep.subr.mxu0 0.0
    %312 = vmatpush1.msra.mxu0 0.0
    %313 = vmatprep.subr.mxu0 0.0
    %314 = vmatpush1.msra.mxu0 0.0
    %315 = vmatprep.subr.mxu0 0.0
    %316 = vmatpush1.msra.mxu0 0.0
    %317 = vmatprep.subr.mxu0 0.0
    %318 = vmatpush1.msra.mxu0 0.0
    %319 = vmatprep.subr.mxu0 0.0
    %320 = vmatpush1.msra.mxu0 0.0
    %321 = vmatprep.subr.mxu0 0.0
    %322 = vmatpush1.msra.mxu0 0.0
    %323 = vmatprep.subr.mxu0 0.0
    %324 = vmatpush1.msra.mxu0 0.0
    %325 = vmatprep.subr.mxu0 0.0
    %326 = vmatpush1.msra.mxu0 0.0
    %327 = vmatprep.subr.mxu0 0.0
    %328 = vmatpush1.msra.mxu0 0.0
    %329 = vmatprep.subr.mxu0 0.0
    %330 = vmatpush1.msra.mxu0 0.0
    %331 = vmatprep.subr.mxu0 0.0
    %332 = vmatpush1.msra.mxu0 0.0
    %333 = vmatprep.subr.mxu0 0.0
    %334 = vmatpush1.msra.mxu0 0.0
    %335 = vmatprep.subr.mxu0 0.0
    %336 = vmatpush1.msra.mxu0 0.0
    %337 = vmatprep.subr.mxu0 0.0
    %338 = vmatpush1.msra.mxu0 0.0
    %339 = vmatprep.subr.mxu0 0.0
    %340 = vmatpush1.msra.mxu0 0.0
    %341 = vmatprep.mubr.f32.mxu0 0.0
    %342 = vmatmul.mubr.f32.gmra.mrb[0].mxu0 %v271
    %v343 = vpop.f32.mrb[0].mxu0
    %v344 = vadd.f32 %v267, %v343
    %v345 = vpop.f32.mrb[0].mxu0
    %346 = vdwg.mxu0
    %v347 = vld [vmem:[%s9] sm:$0xff]
    %v348 = vld [vmem:[%s9 + $0x8] sm:$0xff]
    %v349 = vld [vmem:[%s10] sm:$0x1]
    %v351 = vlaneseq
    %v352 = vshrl.u32 %v351, 7
    %v353 = vsub.s32 0, %v352
    %v354 = vrot.slane %v349, %v353
    %v357 = vsel %vm103, %v344, 0
    %359 = vmatprep.subr.mxu0 0.0
    %360 = vmatpush1.msra.mxu0 %v347
    %361 = vmatprep.subr.mxu0 0.0
    %362 = vmatpush1.msra.mxu0 %v348
    %363 = vmatprep.subr.mxu0 0.0
    %364 = vmatpush1.msra.mxu0 0.0
    %365 = vmatprep.subr.mxu0 0.0
    %366 = vmatpush1.msra.mxu0 0.0
    %367 = vmatprep.subr.mxu0 0.0
    %368 = vmatpush1.msra.mxu0 0.0
    %369 = vmatprep.subr.mxu0 0.0
    %370 = vmatpush1.msra.mxu0 0.0
    %371 = vmatprep.subr.mxu0 0.0
    %372 = vmatpush1.msra.mxu0 0.0
    %373 = vmatprep.subr.mxu0 0.0
    %374 = vmatpush1.msra.mxu0 0.0
    %375 = vmatprep.subr.mxu0 0.0
    %376 = vmatpush1.msra.mxu0 0.0
    %377 = vmatprep.subr.mxu0 0.0
    %378 = vmatpush1.msra.mxu0 0.0
    %379 = vmatprep.subr.mxu0 0.0
    %380 = vmatpush1.msra.mxu0 0.0
    %381 = vmatprep.subr.mxu0 0.0
    %382 = vmatpush1.msra.mxu0 0.0
    %383 = vmatprep.subr.mxu0 0.0
    %384 = vmatpush1.msra.mxu0 0.0
    %385 = vmatprep.subr.mxu0 0.0
    %386 = vmatpush1.msra.mxu0 0.0
    %387 = vmatprep.subr.mxu0 0.0
    %388 = vmatpush1.msra.mxu0 0.0
    %389 = vmatprep.subr.mxu0 0.0
    %390 = vmatpush1.msra.mxu0 0.0
    %391 = vmatprep.subr.mxu0 0.0
    %392 = vmatpush1.msra.mxu0 0.0
    %393 = vmatprep.subr.mxu0 0.0
    %394 = vmatpush1.msra.mxu0 0.0
    %395 = vmatprep.subr.mxu0 0.0
    %396 = vmatpush1.msra.mxu0 0.0
    %397 = vmatprep.subr.mxu0 0.0
    %398 = vmatpush1.msra.mxu0 0.0
    %399 = vmatprep.subr.mxu0 0.0
    %400 = vmatpush1.msra.mxu0 0.0
    %401 = vmatprep.subr.mxu0 0.0
    %402 = vmatpush1.msra.mxu0 0.0
    %403 = vmatprep.subr.mxu0 0.0
    %404 = vmatpush1.msra.mxu0 0.0
    %405 = vmatprep.subr.mxu0 0.0
    %406 = vmatpush1.msra.mxu0 0.0
    %407 = vmatprep.subr.mxu0 0.0
    %408 = vmatpush1.msra.mxu0 0.0
    %409 = vmatprep.subr.mxu0 0.0
    %410 = vmatpush1.msra.mxu0 0.0
    %411 = vmatprep.subr.mxu0 0.0
    %412 = vmatpush1.msra.mxu0 0.0
    %413 = vmatprep.subr.mxu0 0.0
    %414 = vmatpush1.msra.mxu0 0.0
    %415 = vmatprep.subr.mxu0 0.0
    %416 = vmatpush1.msra.mxu0 0.0
    %417 = vmatprep.subr.mxu0 0.0
    %418 = vmatpush1.msra.mxu0 0.0
    %419 = vmatprep.subr.mxu0 0.0
    %420 = vmatpush1.msra.mxu0 0.0
    %421 = vmatprep.subr.mxu0 0.0
    %422 = vmatpush1.msra.mxu0 0.0
    %423 = vmatprep.mubr.f32.mxu0 0.0
    %424 = vmatmul.mubr.f32.gmra.mrb[0].mxu0 %v357
    %v425 = vpop.f32.mrb[0].mxu0
    %v426 = vadd.f32 %v354, %v425
    %v427 = vpop.f32.mrb[0].mxu0
    %428 = vdwg.mxu0
    %v429 = vmul.f32 %v426, %v426
    %v430 = vsel %vm269, %v429, 0.0
    %431 = vadd.xlane.f32.xlu0 %v430
    %v432 = vpop.xlane.xlu0 %431
    %v433 = vrot.slane %v432, 4
    %v434 = vadd.f32 %v432, %v433
    %v435 = vrot.slane %v434, 2
    %v436 = vadd.f32 %v434, %v435
    %v437 = vrot.slane %v436, 1
    %v438 = vadd.f32 %v436, %v437
    %s439 = vtos %v438
    %v440 = vstv %s439
    %v441 = vmax.f32 %v440, 1e-24
    %v442 = vrsqrt.pop %v441
    %v443 = vmul.f32 %v426, %v442
    %444 = vst.msk [vmem:[%s11] sm:$0xff] %vm269, %v443
    %s445 = scalar_lea.vmem %s0, 4
    %v446 = vld [vmem:[%s445] sm:$0xf]
    %v447 = vsel %vm63, %v446, 0.0
    %448 = vadd.xlane.f32.xlu0 %v447
    %v449 = vpop.xlane.xlu0 %448
    %v450 = vmul.f32 %v449, %v67
    %v451 = vsub.f32 %v446, %v450
    %v452 = vmul.f32 %v451, %v451
    %v453 = vsel %vm63, %v452, 0.0
    %454 = vadd.xlane.f32.xlu0 %v453
    %v455 = vpop.xlane.xlu0 %454
    %v456 = vmul.f32 %v455, %v67
    %v457 = vadd.f32 %v456, 1e-05
    %v458 = vrsqrt.pop %v457
    %v459 = vmul.f32 %v451, %v458
    %v460 = vld [vmem:[#allocation2] sm:$0x1]
    %v462 = vlaneseq
    %v463 = vshrl.u32 %v462, 7
    %v464 = vsub.s32 0, %v463
    %v465 = vrot.slane %v460, %v464
    %v467 = vmul.f32 %v459, %v465
    %v468 = vld [vmem:[#allocation4] sm:$0x1]
    %v470 = vlaneseq
    %v471 = vshrl.u32 %v470, 7
    %v472 = vsub.s32 0, %v471
    %v473 = vrot.slane %v468, %v472
    %v475 = vadd.f32 %v467, %v473
    %v476 = vld [vmem:[%s3] sm:$0xff]
    %v477 = vld [vmem:[%s3 + $0x8] sm:$0xff]
    %v478 = vld [vmem:[%s4] sm:$0x1]
    %v480 = vlaneseq
    %v481 = vshrl.u32 %v480, 7
    %v482 = vsub.s32 0, %v481
    %v483 = vrot.slane %v478, %v482
    %v486 = vsel %vm103, %v475, 0
    %488 = vmatprep.subr.mxu0 0.0
    %489 = vmatpush1.msra.mxu0 %v476
    %490 = vmatprep.subr.mxu0 0.0
    %491 = vmatpush1.msra.mxu0 %v477
    %492 = vmatprep.subr.mxu0 0.0
    %493 = vmatpush1.msra.mxu0 0.0
    %494 = vmatprep.subr.mxu0 0.0
    %495 = vmatpush1.msra.mxu0 0.0
    %496 = vmatprep.subr.mxu0 0.0
    %497 = vmatpush1.msra.mxu0 0.0
    %498 = vmatprep.subr.mxu0 0.0
    %499 = vmatpush1.msra.mxu0 0.0
    %500 = vmatprep.subr.mxu0 0.0
    %501 = vmatpush1.msra.mxu0 0.0
    %502 = vmatprep.subr.mxu0 0.0
    %503 = vmatpush1.msra.mxu0 0.0
    %504 = vmatprep.subr.mxu0 0.0
    %505 = vmatpush1.msra.mxu0 0.0
    %506 = vmatprep.subr.mxu0 0.0
    %507 = vmatpush1.msra.mxu0 0.0
    %508 = vmatprep.subr.mxu0 0.0
    %509 = vmatpush1.msra.mxu0 0.0
    %510 = vmatprep.subr.mxu0 0.0
    %511 = vmatpush1.msra.mxu0 0.0
    %512 = vmatprep.subr.mxu0 0.0
    %513 = vmatpush1.msra.mxu0 0.0
    %514 = vmatprep.subr.mxu0 0.0
    %515 = vmatpush1.msra.mxu0 0.0
    %516 = vmatprep.subr.mxu0 0.0
    %517 = vmatpush1.msra.mxu0 0.0
    %518 = vmatprep.subr.mxu0 0.0
    %519 = vmatpush1.msra.mxu0 0.0
    %520 = vmatprep.subr.mxu0 0.0
    %521 = vmatpush1.msra.mxu0 0.0
    %522 = vmatprep.subr.mxu0 0.0
    %523 = vmatpush1.msra.mxu0 0.0
    %524 = vmatprep.subr.mxu0 0.0
    %525 = vmatpush1.msra.mxu0 0.0
    %526 = vmatprep.subr.mxu0 0.0
    %527 = vmatpush1.msra.mxu0 0.0
    %528 = vmatprep.subr.mxu0 0.0
    %529 = vmatpush1.msra.mxu0 0.0
    %530 = vmatprep.subr.mxu0 0.0
    %531 = vmatpush1.msra.mxu0 0.0
    %532 = vmatprep.subr.mxu0 0.0
    %533 = vmatpush1.msra.mxu0 0.0
    %534 = vmatprep.subr.mxu0 0.0
    %535 = vmatpush1.msra.mxu0 0.0
    %536 = vmatprep.subr.mxu0 0.0
    %537 = vmatpush1.msra.mxu0 0.0
    %538 = vmatprep.subr.mxu0 0.0
    %539 = vmatpush1.msra.mxu0 0.0
    %540 = vmatprep.subr.mxu0 0.0
    %541 = vmatpush1.msra.mxu0 0.0
    %542 = vmatprep.subr.mxu0 0.0
    %543 = vmatpush1.msra.mxu0 0.0
    %544 = vmatprep.subr.mxu0 0.0
    %545 = vmatpush1.msra.mxu0 0.0
    %546 = vmatprep.subr.mxu0 0.0
    %547 = vmatpush1.msra.mxu0 0.0
    %548 = vmatprep.subr.mxu0 0.0
    %549 = vmatpush1.msra.mxu0 0.0
    %550 = vmatprep.subr.mxu0 0.0
    %551 = vmatpush1.msra.mxu0 0.0
    %552 = vmatprep.mubr.f32.mxu0 0.0
    %553 = vmatmul.mubr.f32.gmra.mrb[0].mxu0 %v486
    %v554 = vpop.f32.mrb[0].mxu0
    %v555 = vadd.f32 %v483, %v554
    %v556 = vpop.f32.mrb[0].mxu0
    %557 = vdwg.mxu0
    %v558 = vmax.f32 %v555, 0.0
    %v559 = vld [vmem:[%s5] sm:$0xff]
    %v560 = vld [vmem:[%s5 + $0x8] sm:$0xff]
    %v562 = vsel %vm103, %v558, 0
    %564 = vmatprep.subr.mxu0 0.0
    %565 = vmatpush1.msra.mxu0 %v559
    %566 = vmatprep.subr.mxu0 0.0
    %567 = vmatpush1.msra.mxu0 %v560
    %568 = vmatprep.subr.mxu0 0.0
    %569 = vmatpush1.msra.mxu0 0.0
    %570 = vmatprep.subr.mxu0 0.0
    %571 = vmatpush1.msra.mxu0 0.0
    %572 = vmatprep.subr.mxu0 0.0
    %573 = vmatpush1.msra.mxu0 0.0
    %574 = vmatprep.subr.mxu0 0.0
    %575 = vmatpush1.msra.mxu0 0.0
    %576 = vmatprep.subr.mxu0 0.0
    %577 = vmatpush1.msra.mxu0 0.0
    %578 = vmatprep.subr.mxu0 0.0
    %579 = vmatpush1.msra.mxu0 0.0
    %580 = vmatprep.subr.mxu0 0.0
    %581 = vmatpush1.msra.mxu0 0.0
    %582 = vmatprep.subr.mxu0 0.0
    %583 = vmatpush1.msra.mxu0 0.0
    %584 = vmatprep.subr.mxu0 0.0
    %585 = vmatpush1.msra.mxu0 0.0
    %586 = vmatprep.subr.mxu0 0.0
    %587 = vmatpush1.msra.mxu0 0.0
    %588 = vmatprep.subr.mxu0 0.0
    %589 = vmatpush1.msra.mxu0 0.0
    %590 = vmatprep.subr.mxu0 0.0
    %591 = vmatpush1.msra.mxu0 0.0
    %592 = vmatprep.subr.mxu0 0.0
    %593 = vmatpush1.msra.mxu0 0.0
    %594 = vmatprep.subr.mxu0 0.0
    %595 = vmatpush1.msra.mxu0 0.0
    %596 = vmatprep.subr.mxu0 0.0
    %597 = vmatpush1.msra.mxu0 0.0
    %598 = vmatprep.subr.mxu0 0.0
    %599 = vmatpush1.msra.mxu0 0.0
    %600 = vmatprep.subr.mxu0 0.0
    %601 = vmatpush1.msra.mxu0 0.0
    %602 = vmatprep.subr.mxu0 0.0
    %603 = vmatpush1.msra.mxu0 0.0
    %604 = vmatprep.subr.mxu0 0.0
    %605 = vmatpush1.msra.mxu0 0.0
    %606 = vmatprep.subr.mxu0 0.0
    %607 = vmatpush1.msra.mxu0 0.0
    %608 = vmatprep.subr.mxu0 0.0
    %609 = vmatpush1.msra.mxu0 0.0
    %610 = vmatprep.subr.mxu0 0.0
    %611 = vmatpush1.msra.mxu0 0.0
    %612 = vmatprep.subr.mxu0 0.0
    %613 = vmatpush1.msra.mxu0 0.0
    %614 = vmatprep.subr.mxu0 0.0
    %615 = vmatpush1.msra.mxu0 0.0
    %616 = vmatprep.subr.mxu0 0.0
    %617 = vmatpush1.msra.mxu0 0.0
    %618 = vmatprep.subr.mxu0 0.0
    %619 = vmatpush1.msra.mxu0 0.0
    %620 = vmatprep.subr.mxu0 0.0
    %621 = vmatpush1.msra.mxu0 0.0
    %622 = vmatprep.subr.mxu0 0.0
    %623 = vmatpush1.msra.mxu0 0.0
    %624 = vmatprep.subr.mxu0 0.0
    %625 = vmatpush1.msra.mxu0 0.0
    %626 = vmatprep.subr.mxu0 0.0
    %627 = vmatpush1.msra.mxu0 0.0
    %628 = vmatprep.mubr.f32.mxu0 0.0
    %629 = vmatmul.mubr.f32.gmra.mrb[0].mxu0 %v562
    %v630 = vpop.f32.mrb[0].mxu0
    %v631 = vadd.f32 0.0, %v630
    %v632 = vpop.f32.mrb[0].mxu0
    %633 = vdwg.mxu0
    %v634 = vadd.f32 %v446, %v631
    %v635 = vld [vmem:[%s6] sm:$0x1]
    %v637 = vlaneseq
    %v638 = vshrl.u32 %v637, 7
    %v639 = vsub.s32 0, %v638
    %v640 = vrot.slane %v635, %v639
    %v642 = vadd.f32 %v634, %v640
    %v643 = vld [vmem:[%s7] sm:$0xff]
    %v644 = vld [vmem:[%s8] sm:$0xff]
    %646 = vset.pattern.permute.xlu0 0
    %647 = vperm.xlu0 %646, %v644
    %v648 = vpop.permute.xlu0 %647
    %v651 = vsel %vm269, %v643, 0
    %v654 = vsel %vm273, %v642, 0
    %656 = vmatprep.subr.mxu0 0.0
    %657 = vmatpush1.msra.mxu0 %v654
    %658 = vmatprep.subr.mxu0 0.0
    %659 = vmatpush1.msra.mxu0 0.0
    %660 = vmatprep.subr.mxu0 0.0
    %661 = vmatpush1.msra.mxu0 0.0
    %662 = vmatprep.subr.mxu0 0.0
    %663 = vmatpush1.msra.mxu0 0.0
    %664 = vmatprep.subr.mxu0 0.0
    %665 = vmatpush1.msra.mxu0 0.0
    %666 = vmatprep.subr.mxu0 0.0
    %667 = vmatpush1.msra.mxu0 0.0
    %668 = vmatprep.subr.mxu0 0.0
    %669 = vmatpush1.msra.mxu0 0.0
    %670 = vmatprep.subr.mxu0 0.0
    %671 = vmatpush1.msra.mxu0 0.0
    %672 = vmatprep.subr.mxu0 0.0
    %673 = vmatpush1.msra.mxu0 0.0
    %674 = vmatprep.subr.mxu0 0.0
    %675 = vmatpush1.msra.mxu0 0.0
    %676 = vmatprep.subr.mxu0 0.0
    %677 = vmatpush1.msra.mxu0 0.0
    %678 = vmatprep.subr.mxu0 0.0
    %679 = vmatpush1.msra.mxu0 0.0
    %680 = vmatprep.subr.mxu0 0.0
    %681 = vmatpush1.msra.mxu0 0.0
    %682 = vmatprep.subr.mxu0 0.0
    %683 = vmatpush1.msra.mxu0 0.0
    %684 = vmatprep.subr.mxu0 0.0
    %685 = vmatpush1.msra.mxu0 0.0
    %686 = vmatprep.subr.mxu0 0.0
    %687 = vmatpush1.msra.mxu0 0.0
    %688 = vmatprep.subr.mxu0 0.0
    %689 = vmatpush1.msra.mxu0 0.0
    %690 = vmatprep.subr.mxu0 0.0
    %691 = vmatpush1.msra.mxu0 0.0
    %692 = vmatprep.subr.mxu0 0.0
    %693 = vmatpush1.msra.mxu0 0.0
    %694 = vmatprep.subr.mxu0 0.0
    %695 = vmatpush1.msra.mxu0 0.0
    %696 = vmatprep.subr.mxu0 0.0
    %697 = vmatpush1.msra.mxu0 0.0
    %698 = vmatprep.subr.mxu0 0.0
    %699 = vmatpush1.msra.mxu0 0.0
    %700 = vmatprep.subr.mxu0 0.0
    %701 = vmatpush1.msra.mxu0 0.0
    %702 = vmatprep.subr.mxu0 0.0
    %703 = vmatpush1.msra.mxu0 0.0
    %704 = vmatprep.subr.mxu0 0.0
    %705 = vmatpush1.msra.mxu0 0.0
    %706 = vmatprep.subr.mxu0 0.0
    %707 = vmatpush1.msra.mxu0 0.0
    %708 = vmatprep.subr.mxu0 0.0
    %709 = vmatpush1.msra.mxu0 0.0
    %710 = vmatprep.subr.mxu0 0.0
    %711 = vmatpush1.msra.mxu0 0.0
    %712 = vmatprep.subr.mxu0 0.0
    %713 = vmatpush1.msra.mxu0 0.0
    %714 = vmatprep.subr.mxu0 0.0
    %715 = vmatpush1.msra.mxu0 0.0
    %716 = vmatprep.subr.mxu0 0.0
    %717 = vmatpush1.msra.mxu0 0.0
    %718 = vmatprep.subr.mxu0 0.0
    %719 = vmatpush1.msra.mxu0 0.0
    %720 = vmatprep.mubr.f32.mxu0 0.0
    %721 = vmatmul.mubr.f32.gmra.mrb[0].mxu0 %v651
    %v722 = vpop.f32.mrb[0].mxu0
    %v723 = vadd.f32 %v648, %v722
    %v724 = vpop.f32.mrb[0].mxu0
    %725 = vdwg.mxu0
    %v726 = vld [vmem:[%s9] sm:$0xff]
    %v727 = vld [vmem:[%s9 + $0x8] sm:$0xff]
    %v728 = vld [vmem:[%s10] sm:$0x1]
    %v730 = vlaneseq
    %v731 = vshrl.u32 %v730, 7
    %v732 = vsub.s32 0, %v731
    %v733 = vrot.slane %v728, %v732
    %v736 = vsel %vm103, %v723, 0
    %738 = vmatprep.subr.mxu0 0.0
    %739 = vmatpush1.msra.mxu0 %v726
    %740 = vmatprep.subr.mxu0 0.0
    %741 = vmatpush1.msra.mxu0 %v727
    %742 = vmatprep.subr.mxu0 0.0
    %743 = vmatpush1.msra.mxu0 0.0
    %744 = vmatprep.subr.mxu0 0.0
    %745 = vmatpush1.msra.mxu0 0.0
    %746 = vmatprep.subr.mxu0 0.0
    %747 = vmatpush1.msra.mxu0 0.0
    %748 = vmatprep.subr.mxu0 0.0
    %749 = vmatpush1.msra.mxu0 0.0
    %750 = vmatprep.subr.mxu0 0.0
    %751 = vmatpush1.msra.mxu0 0.0
    %752 = vmatprep.subr.mxu0 0.0
    %753 = vmatpush1.msra.mxu0 0.0
    %754 = vmatprep.subr.mxu0 0.0
    %755 = vmatpush1.msra.mxu0 0.0
    %756 = vmatprep.subr.mxu0 0.0
    %757 = vmatpush1.msra.mxu0 0.0
    %758 = vmatprep.subr.mxu0 0.0
    %759 = vmatpush1.msra.mxu0 0.0
    %760 = vmatprep.subr.mxu0 0.0
    %761 = vmatpush1.msra.mxu0 0.0
    %762 = vmatprep.subr.mxu0 0.0
    %763 = vmatpush1.msra.mxu0 0.0
    %764 = vmatprep.subr.mxu0 0.0
    %765 = vmatpush1.msra.mxu0 0.0
    %766 = vmatprep.subr.mxu0 0.0
    %767 = vmatpush1.msra.mxu0 0.0
    %768 = vmatprep.subr.mxu0 0.0
    %769 = vmatpush1.msra.mxu0 0.0
    %770 = vmatprep.subr.mxu0 0.0
    %771 = vmatpush1.msra.mxu0 0.0
    %772 = vmatprep.subr.mxu0 0.0
    %773 = vmatpush1.msra.mxu0 0.0
    %774 = vmatprep.subr.mxu0 0.0
    %775 = vmatpush1.msra.mxu0 0.0
    %776 = vmatprep.subr.mxu0 0.0
    %777 = vmatpush1.msra.mxu0 0.0
    %778 = vmatprep.subr.mxu0 0.0
    %779 = vmatpush1.msra.mxu0 0.0
    %780 = vmatprep.subr.mxu0 0.0
    %781 = vmatpush1.msra.mxu0 0.0
    %782 = vmatprep.subr.mxu0 0.0
    %783 = vmatpush1.msra.mxu0 0.0
    %784 = vmatprep.subr.mxu0 0.0
    %785 = vmatpush1.msra.mxu0 0.0
    %786 = vmatprep.subr.mxu0 0.0
    %787 = vmatpush1.msra.mxu0 0.0
    %788 = vmatprep.subr.mxu0 0.0
    %789 = vmatpush1.msra.mxu0 0.0
    %790 = vmatprep.subr.mxu0 0.0
    %791 = vmatpush1.msra.mxu0 0.0
    %792 = vmatprep.subr.mxu0 0.0
    %793 = vmatpush1.msra.mxu0 0.0
    %794 = vmatprep.subr.mxu0 0.0
    %795 = vmatpush1.msra.mxu0 0.0
    %796 = vmatprep.subr.mxu0 0.0
    %797 = vmatpush1.msra.mxu0 0.0
    %798 = vmatprep.subr.mxu0 0.0
    %799 = vmatpush1.msra.mxu0 0.0
    %800 = vmatprep.subr.mxu0 0.0
    %801 = vmatpush1.msra.mxu0 0.0
    %802 = vmatprep.mubr.f32.mxu0 0.0
    %803 = vmatmul.mubr.f32.gmra.mrb[0].mxu0 %v736
    %v804 = vpop.f32.mrb[0].mxu0
    %v805 = vadd.f32 %v733, %v804
    %v806 = vpop.f32.mrb[0].mxu0
    %807 = vdwg.mxu0
    %v808 = vmul.f32 %v805, %v805
    %v809 = vsel %vm269, %v808, 0.0
    %810 = vadd.xlane.f32.xlu0 %v809
    %v811 = vpop.xlane.xlu0 %810
    %v812 = vrot.slane %v811, 4
    %v813 = vadd.f32 %v811, %v812
    %v814 = vrot.slane %v813, 2
    %v815 = vadd.f32 %v813, %v814
    %v816 = vrot.slane %v815, 1
    %v817 = vadd.f32 %v815, %v816
    %s818 = vtos %v817
    %v819 = vstv %s818
    %v820 = vmax.f32 %v819, 1e-24
    %v821 = vrsqrt.pop %v820
    %v822 = vmul.f32 %v805, %v821
    %s823 = scalar_lea.vmem %s11, 8
    %824 = vst.msk [vmem:[%s823] sm:$0xff] %vm269, %v822
    // Predicated region
    $region54: #{tpu_custom_call.1} parent=1 // pred_check
      _
    $region55: #{tpu_custom_call.1} parent=1 // pred_check_branch
      %826 = sbr.rel (0) target = $region57
    $region56: #{tpu_custom_call.1} parent=1 // pred_region
      _
    $region57: #{tpu_custom_call.1} parent=1 // pred_fallthru
      _
    // Predicated region
    $region58: #{tpu_custom_call.1} parent=1 // pred_check
      _
    $region59: #{tpu_custom_call.1} parent=1 // pred_check_branch
      %828 = sbr.rel (0) target = $region61
    $region60: #{tpu_custom_call.1} parent=1 // pred_region
      _
    $region61: #{tpu_custom_call.1} parent=1 // pred_fallthru
      _
    %829 = vsyncpa [#allocation3], 1
    %830 = vsyncpa [#allocation5], 1

</llo_original>
